<compile_context>
chip_gen: v7x
topology: tpu7x:2x2x1
jax: 0.10.0
libtpu: 0.0.40
codegen_flags: <defaults>
</compile_context>

<pallas_src>
import numpy as np
import jax
import jax.numpy as jnp
from jax.experimental import pallas as pl
from jax.experimental.pallas import tpu as pltpu


def _vote_kernel(p_ref, w_ref, out_ref):
    """Votes for one (B-chunk, batch-element) grid step.

    p_ref:   (bc, P_i, P_m, L)     pose patches, L = F*F*K*K on the lane axis
    w_ref:   (bc, C, P_m, P_j, L)  transforms, (F,F)-replicated, VMEM-resident
    out_ref: (bc, C, P_i, P_j, L)  votes, row order == V_ji consumer order
    """
    p = p_ref[...].astype(jnp.float32)
    w = w_ref[...].astype(jnp.float32)
    P = p.shape[2]
    # Contraction over P_m (depth 4): unrolled VPU FMA chain, f32 accumulate.
    # All broadcasts except the p-side P_j one are over leading dims (free
    # vreg reuse).
    # TODO(synk): the p factor is sublane-broadcast along P_j per m; a
    # stride-0 broadcast load (pl.ds(row, n, stride=0)) or wrapper-side P_j
    # replication would move it off the XLU at the cost of 4x p HBM traffic.
    acc = p[:, None, :, 0, None, :] * w[:, :, None, 0, :, :]
    for m in range(1, P):
        acc = acc + p[:, None, :, m, None, :] * w[:, :, None, m, :, :]
    out_ref[...] = acc.astype(out_ref.dtype)


def _pick_b_chunk(B, C, P, L, itemsize, budget_bytes=8 * 1024 * 1024):
    """Largest divisor of B whose per-step blocks fit a VMEM working-set budget."""
    for bc in sorted((d for d in range(1, B + 1) if B % d == 0), reverse=True):
        p_bytes = bc * P * P * L * itemsize
        wo_bytes = 2 * bc * C * P * P * L * itemsize   # w block + out block
        if p_bytes + wo_bytes <= budget_bytes:
            return bc
    return 1


def pose_votes_pallas(p_lhs, w_packed, *, out_dtype=None):
    """(batch,B,P,P,L) x (B,C,P,P,L) -> (batch,B,C,P,P,L) votes.

    Grid = (B // bc, batch).  batch is the *inner* axis and w_packed's block
    index only depends on the outer axis, so the weight pack is fetched once
    per outer step and stays VMEM-resident across all batch elements.
    """
    batch, B, P, _, L = p_lhs.shape
    C = w_packed.shape[1]
    if out_dtype is None:
        out_dtype = p_lhs.dtype
    itemsize = np.dtype(out_dtype).itemsize
    bc = _pick_b_chunk(B, C, P, L, itemsize)

    # Per-step working set (logical bytes); VMEM tiling pads the (P_j, L)
    # minor dims to (8, 128) and double-buffers, hence the 8x headroom.
    # Cap below v7x's 64 MiB physical VMEM.
    blk_bytes = (bc * P * P * L + 2 * bc * C * P * P * L) * itemsize
    vmem_limit = int(min(56 * 1024 * 1024, max(16 * 1024 * 1024, 8 * blk_bytes)))

    flops = 2 * batch * B * C * P * P * P * L
    bytes_accessed = (p_lhs.size + w_packed.size
                      + batch * B * C * P * P * L) * itemsize

    return pl.pallas_call(
        _vote_kernel,
        out_shape=jax.ShapeDtypeStruct((batch, B, C, P, P, L), out_dtype),
        grid=(B // bc, batch),
        in_specs=[
            pl.BlockSpec((None, bc, P, P, L), lambda g, b: (b, g, 0, 0, 0)),
            pl.BlockSpec((bc, C, P, P, L), lambda g, b: (g, 0, 0, 0, 0)),
        ],
        out_specs=pl.BlockSpec((None, bc, C, P, P, L),
                               lambda g, b: (b, g, 0, 0, 0, 0)),
        compiler_params=pltpu.CompilerParams(
            dimension_semantics=("parallel", "parallel"),
            vmem_limit_bytes=vmem_limit),
        cost_estimate=pl.CostEstimate(flops=flops, transcendentals=0,
                                      bytes_accessed=bytes_accessed),
    )(p_lhs, w_packed)


def _unfold(x, K, S, Fo):
    """torch .unfold(-2,K,S).unfold(-1,K,S): (..., H, W) -> (..., Fo, Fo, K, K).

    K*K strided slices (fused into the downstream pack) instead of an
    advanced-indexing gather.
    """
    lim = (Fo - 1) * S + 1
    rows = []
    for kh in range(K):
        cols = [x[..., kh:kh + lim:S, kw:kw + lim:S] for kw in range(K)]
        rows.append(jnp.stack(cols, axis=-1))          # (..., Fo, Fo, K_w)
    return jnp.stack(rows, axis=-2)                    # (..., Fo, Fo, K_h, K_w)


class ConvCapsules2d:
    """JAX/Pallas port of the PyTorch ConvCapsules2d forward pass."""

    def __init__(self, in_caps, out_caps, pose_dim, kernel_size, stride,
                 padding=0, weight_init="xavier_uniform", share_W_ij=False,
                 coor_add=False, vote_dtype=jnp.float32, *, key):
        self.B = in_caps
        self.C = out_caps
        self.P = pose_dim
        self.PP = int(np.max([2, self.P * self.P]))
        self.K = kernel_size
        self.S = stride
        self.padding = padding
        self.share_W_ij = share_W_ij
        self.coor_add = coor_add
        # HBM dtype of poses / W / votes around the Pallas kernel.  bf16 halves
        # HBM traffic on v6e/v5e; accumulation stays f32 inside the kernel.
        self.vote_dtype = vote_dtype

        shape = (1, self.B, self.C, 1, self.P, self.P, 1, 1, self.K, self.K)
        family, kind = weight_init.split("_")
        if family == "xavier":
            fan_in = self.B * self.K * self.K * self.PP
            fan_out = self.C * self.K * self.K * self.PP
            std = np.sqrt(2.0 / (fan_in + fan_out))
        elif family == "kaiming":
            fan_in = self.B * self.K * self.K * self.PP
            std = np.sqrt(2.0) / np.sqrt(fan_in)
        else:
            # TODO(synk): 'noisy_identity' init not ported (not the default path).
            raise NotImplementedError(weight_init)
        bound = np.sqrt(3.0) * std
        if kind == "uniform":
            self.W_ij = jax.random.uniform(
                key, shape, jnp.float32, minval=-bound, maxval=bound)
        elif kind == "normal":
            self.W_ij = std * jax.random.normal(key, shape, jnp.float32)
        else:
            raise NotImplementedError(weight_init)

        if self.padding != 0 and isinstance(self.padding, int):
            self.padding = [self.padding] * 4

        # Weight-derived, shape-static packs are cached across calls: the
        # F^2-replicated pack is no longer rebuilt (and round-tripped through
        # HBM) every forward.  Clear the cache if self.W_ij is updated.
        self._w_cache = {}

    def _w_packed(self, K, Fo, dtype):
        key = (int(K), int(Fo), np.dtype(dtype).name)
        if key not in self._w_cache:
            # Like PyTorch, this errors if share_W_ij=True and the stored W
            # kernel dims are neither 1 nor the runtime window K.
            W = self.W_ij[0, :, :, 0, :, :, 0, 0, :, :]     # (B,C,Pm,Pj,Kh,Kw)
            W = jnp.broadcast_to(W, (self.B, self.C, self.P, self.P, K, K))
            L = Fo * Fo * K * K
            wp = jnp.broadcast_to(
                W[:, :, :, :, None, None, :, :],
                (self.B, self.C, self.P, self.P, Fo, Fo, K, K))
            self._w_cache[key] = wp.reshape(
                self.B, self.C, self.P, self.P, L).astype(dtype)
        return self._w_cache[key]

    def __call__(self, activations, poses):
        if self.padding != 0:
            pl_, pr, pt, pb = self.padding
            activations = jnp.pad(
                activations, ((0, 0), (0, 0), (pt, pb), (pl_, pr)))
            poses = jnp.pad(
                poses, ((0, 0), (0, 0), (0, 0), (0, 0), (pt, pb), (pl_, pr)))

        K = poses.shape[-1] if self.share_W_ij else self.K
        S = self.S
        Fo = (poses.shape[-1] - K) // S + 1
        b, Bc, C, P = activations.shape[0], self.B, self.C, self.P
        L = Fo * Fo * K * K

        # -- K x K sliding-window extraction (torch .unfold) ------------------
        # K^2 strided slices (no XLA gather).  The K^2/S^2 patch duplication is
        # materialized once as the kernel's packed LHS.
        # TODO(synk): move the unfold fully into the kernel (per-(k_h,k_w)
        # window reads from the un-duplicated poses slab) to also remove that
        # duplication at large shapes.
        pose_patches = _unfold(poses, K, S, Fo)        # (b, B, P, P, F, F, K, K)
        act_patches = _unfold(activations, K, S, Fo)   # (b, B, F, F, K, K)
        activations_out = act_patches.reshape(b, Bc, 1, 1, 1, Fo, Fo, K, K)

        # LHS in the kernel layout (pure reshape): rows (P_i, P_m), lanes L.
        p_lhs = pose_patches.reshape(b, Bc, P, P, L).astype(self.vote_dtype)

        # Cached, F^2-replicated weight pack in the same lane layout.
        w_packed = self._w_packed(K, Fo, self.vote_dtype)

        votes = pose_votes_pallas(p_lhs, w_packed, out_dtype=self.vote_dtype)

        # Kernel already emits the consumer ordering -> pure reshape, no
        # 9-axis transpose / extra HBM round-trip.
        # TODO(synk): if the downstream VB-routing stage becomes a Pallas
        # kernel, keep votes in the packed (b, B, C, P, P, L) layout instead.
        V_ji = votes.reshape(b, Bc, C, P * P, 1, Fo, Fo, K, K)

        # TODO(synk): coor_add coordinate-addition branch not ported
        # (defaults to False in the module).
        return activations_out, V_ji


def reference_forward(caps, activations, poses):
    """Pure-JAX f32 replication of the PyTorch broadcast/sum semantics."""
    K, S = caps.K, caps.S
    Fo = (poses.shape[-1] - K) // S + 1
    b = activations.shape[0]
    idx = jnp.arange(Fo)[:, None] * S + jnp.arange(K)[None, :]
    hh = idx[:, None, :, None]
    ww = idx[None, :, None, :]
    pose_patches = poses[:, :, :, :, hh, ww]           # (b,B,P,P,F,F,K,K)
    act_patches = activations[:, :, hh, ww]            # (b,B,F,F,K,K)
    p = pose_patches[:, :, None, :, :, None, :, :, :, :]   # (b,B,1,P,P,1,F,F,K,K)
    w = caps.W_ij                                            # (1,B,C,1,P,P,1,1,K,K)
    V = (p * w).sum(axis=4)                                  # (b,B,C,P,P,F,F,K,K)
    V = V.reshape(b, caps.B, caps.C, caps.P * caps.P, 1, Fo, Fo, K, K)
    A = act_patches.reshape(b, caps.B, 1, 1, 1, Fo, Fo, K, K)
    return A, V


if __name__ == "__main__":
    key = jax.random.PRNGKey(0)
    k_w, k_act, k_pose = jax.random.split(key, 3)

    batch, B, C, P, K, S = 2, 4, 4, 4, 3, 2
    H = W = 7                       # -> F = (7 - 3) // 2 + 1 = 3
    Fo = (H - K) // S + 1

    activations = jax.random.uniform(k_act, (batch, B, H, W), jnp.float32)
    poses = jax.random.normal(k_pose, (batch, B, P, P, H, W), jnp.float32)

    # --- f32 path: tight tolerances -------------------------------------
    caps = ConvCapsules2d(B, C, P, K, S, key=k_w)
    act_out, V_ji = caps(activations, poses)
    act_out = jax.block_until_ready(act_out)
    V_ji = jax.block_until_ready(V_ji)

    act_ref, V_ref = reference_forward(caps, activations, poses)

    assert act_out.shape == (batch, B, 1, 1, 1, Fo, Fo, K, K), act_out.shape
    assert V_ji.shape == (batch, B, C, P * P, 1, Fo, Fo, K, K), V_ji.shape
    np.testing.assert_allclose(np.asarray(act_out), np.asarray(act_ref),
                               rtol=1e-6, atol=1e-6)
    np.testing.assert_allclose(np.asarray(V_ji), np.asarray(V_ref),
                               rtol=1e-5, atol=1e-6)

    # Second call reuses the cached weight pack (exercises the cache path).
    _, V_ji2 = caps(activations, poses)
    np.testing.assert_allclose(np.asarray(jax.block_until_ready(V_ji2)),
                               np.asarray(V_ref), rtol=1e-5, atol=1e-6)

    # --- bf16-on-HBM path (v6e/v5e traffic halving), f32 accumulation ----
    caps_bf16 = ConvCapsules2d(B, C, P, K, S, vote_dtype=jnp.bfloat16, key=k_w)
    _, V_bf16 = caps_bf16(activations, poses)
    V_bf16 = jax.block_until_ready(V_bf16)
    assert V_bf16.dtype == jnp.bfloat16, V_bf16.dtype
    np.testing.assert_allclose(np.asarray(V_bf16.astype(jnp.float32)),
                               np.asarray(V_ref), rtol=2e-2, atol=2e-2)

    print("KERNEL_OK")
</pallas_src>

<mosaic_0001>
module attributes {stable_mosaic.version = 11 : i64} {
  func.func @_vote_kernel(%arg0: i32, %arg1: i32, %arg2: memref<1x4x4x4x81xf32, #tpu.memory_space<vmem>>, %arg3: memref<4x4x4x4x81xf32, #tpu.memory_space<vmem>>, %arg4: memref<1x4x4x4x4x81xf32, #tpu.memory_space<vmem>>) attributes {dimension_semantics = [#tpu.dimension_semantics<parallel>, #tpu.dimension_semantics<parallel>], iteration_bounds = array<i64: 1, 2>, scalar_prefetch = 0 : i64, scratch_operands = 0 : i64, tpu.core_type = #tpu.core_type<tc>, window_params = [{transform_indices = @transform_0, window_bounds = array<i64: 1, 4, 4, 4, 81>}, {transform_indices = @transform_1, window_bounds = array<i64: 4, 4, 4, 4, 81>}, {transform_indices = @transform_2, window_bounds = array<i64: 1, 4, 4, 4, 4, 81>}]} {
    %c0 = arith.constant 0 : index
    %c0_0 = arith.constant 0 : index
    %c0_1 = arith.constant 0 : index
    %c0_2 = arith.constant 0 : index
    %c0_3 = arith.constant 0 : index
    %0 = vector.load %arg2[%c0, %c0_0, %c0_1, %c0_2, %c0_3] : memref<1x4x4x4x81xf32, #tpu.memory_space<vmem>>, vector<1x4x4x4x81xf32>
    %1 = vector.shape_cast %0 : vector<1x4x4x4x81xf32> to vector<4x4x4x81xf32>
    %c0_4 = arith.constant 0 : index
    %c0_5 = arith.constant 0 : index
    %c0_6 = arith.constant 0 : index
    %c0_7 = arith.constant 0 : index
    %c0_8 = arith.constant 0 : index
    %2 = vector.load %arg3[%c0_4, %c0_5, %c0_6, %c0_7, %c0_8] : memref<4x4x4x4x81xf32, #tpu.memory_space<vmem>>, vector<4x4x4x4x81xf32>
    %3 = vector.extract_strided_slice %1 {offsets = [0, 0, 0, 0], sizes = [4, 4, 1, 81], strides = [1, 1, 1, 1]} : vector<4x4x4x81xf32> to vector<4x4x1x81xf32>
    %4 = vector.shape_cast %3 : vector<4x4x1x81xf32> to vector<4x4x81xf32>
    %5 = vector.shape_cast %4 : vector<4x4x81xf32> to vector<4x1x4x1x81xf32>
    %6 = vector.extract_strided_slice %2 {offsets = [0, 0, 0, 0, 0], sizes = [4, 4, 1, 4, 81], strides = [1, 1, 1, 1, 1]} : vector<4x4x4x4x81xf32> to vector<4x4x1x4x81xf32>
    %7 = vector.shape_cast %6 : vector<4x4x1x4x81xf32> to vector<4x4x4x81xf32>
    %8 = vector.shape_cast %7 : vector<4x4x4x81xf32> to vector<4x4x1x4x81xf32>
    %9 = vector.broadcast %5 : vector<4x1x4x1x81xf32> to vector<4x4x4x4x81xf32>
    %10 = vector.broadcast %8 : vector<4x4x1x4x81xf32> to vector<4x4x4x4x81xf32>
    %11 = arith.mulf %9, %10 : vector<4x4x4x4x81xf32>
    %12 = vector.extract_strided_slice %1 {offsets = [0, 0, 1, 0], sizes = [4, 4, 1, 81], strides = [1, 1, 1, 1]} : vector<4x4x4x81xf32> to vector<4x4x1x81xf32>
    %13 = vector.shape_cast %12 : vector<4x4x1x81xf32> to vector<4x4x81xf32>
    %14 = vector.shape_cast %13 : vector<4x4x81xf32> to vector<4x1x4x1x81xf32>
    %15 = vector.extract_strided_slice %2 {offsets = [0, 0, 1, 0, 0], sizes = [4, 4, 1, 4, 81], strides = [1, 1, 1, 1, 1]} : vector<4x4x4x4x81xf32> to vector<4x4x1x4x81xf32>
    %16 = vector.shape_cast %15 : vector<4x4x1x4x81xf32> to vector<4x4x4x81xf32>
    %17 = vector.shape_cast %16 : vector<4x4x4x81xf32> to vector<4x4x1x4x81xf32>
    %18 = vector.broadcast %14 : vector<4x1x4x1x81xf32> to vector<4x4x4x4x81xf32>
    %19 = vector.broadcast %17 : vector<4x4x1x4x81xf32> to vector<4x4x4x4x81xf32>
    %20 = arith.mulf %18, %19 : vector<4x4x4x4x81xf32>
    %21 = arith.addf %11, %20 : vector<4x4x4x4x81xf32>
    %22 = vector.extract_strided_slice %1 {offsets = [0, 0, 2, 0], sizes = [4, 4, 1, 81], strides = [1, 1, 1, 1]} : vector<4x4x4x81xf32> to vector<4x4x1x81xf32>
    %23 = vector.shape_cast %22 : vector<4x4x1x81xf32> to vector<4x4x81xf32>
    %24 = vector.shape_cast %23 : vector<4x4x81xf32> to vector<4x1x4x1x81xf32>
    %25 = vector.extract_strided_slice %2 {offsets = [0, 0, 2, 0, 0], sizes = [4, 4, 1, 4, 81], strides = [1, 1, 1, 1, 1]} : vector<4x4x4x4x81xf32> to vector<4x4x1x4x81xf32>
    %26 = vector.shape_cast %25 : vector<4x4x1x4x81xf32> to vector<4x4x4x81xf32>
    %27 = vector.shape_cast %26 : vector<4x4x4x81xf32> to vector<4x4x1x4x81xf32>
    %28 = vector.broadcast %24 : vector<4x1x4x1x81xf32> to vector<4x4x4x4x81xf32>
    %29 = vector.broadcast %27 : vector<4x4x1x4x81xf32> to vector<4x4x4x4x81xf32>
    %30 = arith.mulf %28, %29 : vector<4x4x4x4x81xf32>
    %31 = arith.addf %21, %30 : vector<4x4x4x4x81xf32>
    %32 = vector.extract_strided_slice %1 {offsets = [0, 0, 3, 0], sizes = [4, 4, 1, 81], strides = [1, 1, 1, 1]} : vector<4x4x4x81xf32> to vector<4x4x1x81xf32>
    %33 = vector.shape_cast %32 : vector<4x4x1x81xf32> to vector<4x4x81xf32>
    %34 = vector.shape_cast %33 : vector<4x4x81xf32> to vector<4x1x4x1x81xf32>
    %35 = vector.extract_strided_slice %2 {offsets = [0, 0, 3, 0, 0], sizes = [4, 4, 1, 4, 81], strides = [1, 1, 1, 1, 1]} : vector<4x4x4x4x81xf32> to vector<4x4x1x4x81xf32>
    %36 = vector.shape_cast %35 : vector<4x4x1x4x81xf32> to vector<4x4x4x81xf32>
    %37 = vector.shape_cast %36 : vector<4x4x4x81xf32> to vector<4x4x1x4x81xf32>
    %38 = vector.broadcast %34 : vector<4x1x4x1x81xf32> to vector<4x4x4x4x81xf32>
    %39 = vector.broadcast %37 : vector<4x4x1x4x81xf32> to vector<4x4x4x4x81xf32>
    %40 = arith.mulf %38, %39 : vector<4x4x4x4x81xf32>
    %41 = arith.addf %31, %40 : vector<4x4x4x4x81xf32>
    %c0_9 = arith.constant 0 : index
    %c0_10 = arith.constant 0 : index
    %c0_11 = arith.constant 0 : index
    %c0_12 = arith.constant 0 : index
    %c0_13 = arith.constant 0 : index
    %c0_14 = arith.constant 0 : index
    %42 = vector.load %arg4[%c0_9, %c0_10, %c0_11, %c0_12, %c0_13, %c0_14] : memref<1x4x4x4x4x81xf32, #tpu.memory_space<vmem>>, vector<1x4x4x4x4x81xf32>
    %43 = vector.shape_cast %42 : vector<1x4x4x4x4x81xf32> to vector<4x4x4x4x81xf32>
    %44 = vector.shape_cast %41 : vector<4x4x4x4x81xf32> to vector<1x4x4x4x4x81xf32>
    tpu.vector_store %arg4[%c0_9, %c0_10, %c0_11, %c0_12, %c0_13, %c0_14], %44 {strides = array<i32>} : memref<1x4x4x4x4x81xf32, #tpu.memory_space<vmem>>, vector<1x4x4x4x4x81xf32>,
    return
  }
  func.func @transform_0(%arg0: i32, %arg1: i32) -> (i32, i32, i32, i32, i32) {
    %c0_i32 = arith.constant 0 : i32
    %c0_i32_0 = arith.constant 0 : i32
    %c0_i32_1 = arith.constant 0 : i32
    %c0_i32_2 = arith.constant 0 : i32
    return %arg1, %arg0, %c0_i32, %c0_i32_0, %c0_i32_1 : i32, i32, i32, i32, i32
  }
  func.func @transform_1(%arg0: i32, %arg1: i32) -> (i32, i32, i32, i32, i32) {
    %c0_i32 = arith.constant 0 : i32
    %c0_i32_0 = arith.constant 0 : i32
    %c0_i32_1 = arith.constant 0 : i32
    %c0_i32_2 = arith.constant 0 : i32
    %c0_i32_3 = arith.constant 0 : i32
    return %arg0, %c0_i32, %c0_i32_0, %c0_i32_1, %c0_i32_2 : i32, i32, i32, i32, i32
  }
  func.func @transform_2(%arg0: i32, %arg1: i32) -> (i32, i32, i32, i32, i32, i32) {
    %c0_i32 = arith.constant 0 : i32
    %c0_i32_0 = arith.constant 0 : i32
    %c0_i32_1 = arith.constant 0 : i32
    %c0_i32_2 = arith.constant 0 : i32
    %c0_i32_3 = arith.constant 0 : i32
    return %arg1, %arg0, %c0_i32, %c0_i32_0, %c0_i32_1, %c0_i32_2 : i32, i32, i32, i32, i32, i32
  }
}

</mosaic_0001>

<llo_original>
// kernel: tpu_custom_call.1
$region0: #{tpu_custom_call.1}
  #allocation0 [shape = 'u32[]', space=smem, size = 0x4, offset = 0x4, fixed_abs, tag = 'smem constant byte address 0x4 - core index']
  #allocation1 [shape = 'u32[144,128]{1,0:T(1,128)}', space=vmem, size = 0x12000, scoped, tag = 'internal scratch']
  %s0 = inlined_call_operand.hbm [shape: f32[2,4,4,4,81], index: 0, kind: input, shape index: {}]
  %s1 = inlined_call_operand.hbm [shape: f32[4,4,4,4,81], index: 1, kind: input, shape index: {}]
  %s2 = inlined_call_operand.hbm [shape: f32[2,4,4,4,4,81], index: 2, kind: output, shape index: {}]
  %s3 = sld [smem:[#allocation0]]
  $region49: #{tpu_custom_call.1} parent=0
    _
  %s5 = ssub.s32 1, %s3
  %s6 = scalar_select 0, %s5, %s3
  $region1: #{tpu_custom_call.1} parent=0
    #allocation2 [shape = 'u8[65536]{0}', space=vmem, size = 0x10000, scoped, tag = 'input window, operand 0']
    #allocation3 [shape = 's32[2]{0}', space=sflag, size = 0x8, scoped, tag = 'scoped memory for tpu_custom_call.1']
    #allocation4 [shape = 's32[2]{0}', space=sflag, size = 0x8, scoped, tag = 'scoped memory for tpu_custom_call.1']
    #allocation5 [shape = 'u8[131072]{0}', space=vmem, size = 0x20000, scoped, tag = 'input window, operand 1, single buffered']
    #allocation6 [shape = 's32[1]{0}', space=sflag, size = 0x4, scoped, tag = 'scoped memory for tpu_custom_call.1']
    #allocation7 [shape = 'u8[262144]{0}', space=vmem, size = 0x40000, scoped, tag = 'output window, operand 0']
    %7 = vsyncpa [#allocation3], 0
    %s8 = scalar_lea.sflag [#allocation3], 1
    %9 = vsyncpa %s8, 0
    %10 = vsyncpa [#allocation6], 0
    %11 = vsyncpa [#allocation4], 0
    %s12 = scalar_lea.sflag [#allocation4], 1
    %13 = vsyncpa %s12, 0
    loop: start=0, step=1, limit=4
    $region2: #{tpu_custom_call.1} parent=1 // loop_pre_header
      _
    $region3: #{tpu_custom_call.1} parent=1 // loop_header
      %s15 = sphi 0, %s19
      %p16 = scmp.ge.s32.totalorder %s15, 4
      %s22 = sphi 0, %s34
      %s23 = sphi 0, %s30
      %s24 = sphi 0, %s22
      %s25 = sphi 0, %s23
      %s26 = sphi 0, %s24
      %s27 = sphi 0, %s25
      %s39 = sphi 0, %s41
      %s42 = sphi 0, %s39
      %s43 = sphi 0, %s42
      %s59 = sphi 0, %s43
      %s65 = sphi 0, %s67
      %s68 = sphi 0, %s65
      %s69 = sphi 0, %s68
      %s85 = sphi 0, %s69
      %s93 = sphi 0, %s95
      %s96 = sphi 0, %s93
      %s97 = sphi 0, %s96
      %s113 = sphi 0, %s97
    $region4: #{tpu_custom_call.1} parent=1 // loop_header_branch
      %18 = sbr.rel (%p16) target = $region8
    $region5: #{tpu_custom_call.1} parent=1 // loop_body
      %s20 = ssub.s32 %s15, 1
      %s21 = ssub.s32 %s15, 2
      %s28 = sadd.s32 1, %s23
      %p29 = scmp.ge.s32.totalorder %s28, 2
      %s30 = scalar_select %p29, 0, %s28
      %s31 = sadd.s32 1, %s22
      %s32 = scalar_select %p29, %s31, %s22
      %p33 = scmp.ge.s32.totalorder %s32, 1
      %s34 = scalar_select %p33, 0, %s32
      %s35 = ssub.s32 %s23, %s30
      %s36 = ssub.s32 %s22, %s34
      %s37 = sor.u32 %s35, %s36
      %p38 = scmp.eq.s32.totalorder %s37, 0
      %s40 = sadd.s32 %s39, 1
      %s41 = scalar_select %p38, %s39, %s40
      %p44 = pneg %p38
      %p45 = scmp.eq.s32.totalorder %s15, 1
      %p46 = por %p44, %p45
      %p47 = scmp.ne.s32.totalorder %s39, %s42
      %p48 = scmp.eq.s32.totalorder %s15, 0
      %p49 = por %p47, %p48
      %p50 = scmp.ne.s32.totalorder %s39, %s42
      %p51 = scmp.eq.s32.totalorder %s20, 1
      %p52 = por %p50, %p51
      %p53 = scmp.ne.s32.totalorder %s42, %s43
      %p54 = scmp.eq.s32.totalorder %s20, 0
      %p55 = por %p53, %p54
      %p56 = scmp.ne.s32.totalorder %s42, %s43
      %p57 = scmp.eq.s32.totalorder %s21, 1
      %p58 = por %p56, %p57
      %p60 = scmp.ne.s32.totalorder %s43, %s59
      %p61 = scmp.eq.s32.totalorder %s21, 0
      %p62 = por %p60, %p61
      %s63 = ssub.s32 %s22, %s34
      %p64 = scmp.eq.s32.totalorder %s63, 0
      %s66 = sadd.s32 %s65, 1
      %s67 = scalar_select %p64, %s65, %s66
      %p70 = pneg %p64
      %p71 = scmp.eq.s32.totalorder %s15, 1
      %p72 = por %p70, %p71
      %p73 = scmp.ne.s32.totalorder %s65, %s68
      %p74 = scmp.eq.s32.totalorder %s15, 0
      %p75 = por %p73, %p74
      %p76 = scmp.ne.s32.totalorder %s65, %s68
      %p77 = scmp.eq.s32.totalorder %s20, 1
      %p78 = por %p76, %p77
      %p79 = scmp.ne.s32.totalorder %s68, %s69
      %p80 = scmp.eq.s32.totalorder %s20, 0
      %p81 = por %p79, %p80
      %p82 = scmp.ne.s32.totalorder %s68, %s69
      %p83 = scmp.eq.s32.totalorder %s21, 1
      %p84 = por %p82, %p83
      %p86 = scmp.ne.s32.totalorder %s69, %s85
      %p87 = scmp.eq.s32.totalorder %s21, 0
      %p88 = por %p86, %p87
      %s89 = ssub.s32 %s23, %s30
      %s90 = ssub.s32 %s22, %s34
      %s91 = sor.u32 %s89, %s90
      %p92 = scmp.eq.s32.totalorder %s91, 0
      %s94 = sadd.s32 %s93, 1
      %s95 = scalar_select %p92, %s93, %s94
      %p98 = pneg %p92
      %p99 = scmp.eq.s32.totalorder %s15, 1
      %p100 = por %p98, %p99
      %p101 = scmp.ne.s32.totalorder %s93, %s96
      %p102 = scmp.eq.s32.totalorder %s15, 0
      %p103 = por %p101, %p102
      %p104 = scmp.ne.s32.totalorder %s93, %s96
      %p105 = scmp.eq.s32.totalorder %s20, 1
      %p106 = por %p104, %p105
      %p107 = scmp.ne.s32.totalorder %s96, %s97
      %p108 = scmp.eq.s32.totalorder %s20, 0
      %p109 = por %p107, %p108
      %p110 = scmp.ne.s32.totalorder %s96, %s97
      %p111 = scmp.eq.s32.totalorder %s21, 1
      %p112 = por %p110, %p111
      %p114 = scmp.ne.s32.totalorder %s97, %s113
      %p115 = scmp.eq.s32.totalorder %s21, 0
      %p116 = por %p114, %p115
      %p117 = scmp.le.s32.totalorder 1, %s15
      %p118 = scmp.lt.s32.totalorder %s15, 3
      %p119 = pnand %p117, %p118
      %p120 = pneg %p119
      // Predicated region
      $region9: #{tpu_custom_call.1} parent=5 // pred_check
        _
      $region10: #{tpu_custom_call.1} parent=5 // pred_check_branch
        %122 = sbr.rel (%p119) target = $region12
      $region11: #{tpu_custom_call.1} parent=5 // pred_region
        %s123 = ssub.s32 %s15, 1
        // Predicated region
        $region13: #{tpu_custom_call.1} parent=11 // pred_check
          %p124 = pneg %p81
        $region14: #{tpu_custom_call.1} parent=11 // pred_check_branch
          %126 = sbr.rel (%p124) target = $region16
        $region15: #{tpu_custom_call.1} parent=11 // pred_region
          %s127 = smul.u32 4, %s24
          %s129 = ssub.s32 4096, 4096
          %130 = vsyncadd [#allocation6], %s129
          %s131 = smul.addr %s127, 16
          %s132 = smul.addr %s131, 64
          %s133 = scalar_lea.hbm %s1, %s132
          %s134 = sshll.u32 [#allocation5], 4
          %s135 = int_to_ptr.vmem [resolvable:$true] %s134
          %140 = dma.hbm_to_vmem [thread:$0]  %s133, 4096, %s135, [#allocation6], 64, 64, 4
        $region16: #{tpu_custom_call.1} parent=11 // pred_fallthru
          _
      $region12: #{tpu_custom_call.1} parent=5 // pred_fallthru
        _
      %p141 = scmp.lt.s32.totalorder %s15, 2
      // Predicated region
      $region17: #{tpu_custom_call.1} parent=5 // pred_check
        %p142 = pneg %p141
      $region18: #{tpu_custom_call.1} parent=5 // pred_check_branch
        %144 = sbr.rel (%p142) target = $region20
      $region19: #{tpu_custom_call.1} parent=5 // pred_region
        // Predicated region
        $region21: #{tpu_custom_call.1} parent=19 // pred_check
          %p145 = pneg %p49
        $region22: #{tpu_custom_call.1} parent=19 // pred_check_branch
          %147 = sbr.rel (%p145) target = $region24
        $region23: #{tpu_custom_call.1} parent=19 // pred_region
          %s148 = sand.u32 %s39, 1
          %s149 = scalar_lea.sflag [#allocation3], %s148
          %s150 = sand.u32 %s39, 1
          %s151 = smul.addr %s150, 64
          %s152 = scalar_lea.vmem [#allocation2], %s151
          %s153 = smul.u32 4, %s22
          %s155 = ssub.s32 1024, 1024
          %156 = vsyncadd %s149, %s155
          %s157 = smul.addr %s153, 4
          %s158 = smul.addr %s23, 16
          %s159 = sadd.s32 %s157, %s158
          %s160 = smul.addr %s159, 64
          %s161 = scalar_lea.hbm %s0, %s160
          %s162 = sshll.u32 %s152, 4
          %s163 = int_to_ptr.vmem [resolvable:$true] %s162
          %168 = dma.hbm_to_vmem [thread:$0]  %s161, 1024, %s163, %s149, 64, 64, 4
        $region24: #{tpu_custom_call.1} parent=19 // pred_fallthru
          _
      $region20: #{tpu_custom_call.1} parent=5 // pred_fallthru
        _
      %p169 = scmp.le.s32.totalorder 1, %s15
      %p170 = scmp.lt.s32.totalorder %s15, 3
      %p171 = pnand %p169, %p170
      %p172 = pneg %p171
      // Predicated region
      $region25: #{tpu_custom_call.1} parent=5 // pred_check
        _
      $region26: #{tpu_custom_call.1} parent=5 // pred_check_branch
        %174 = sbr.rel (%p171) target = $region28
      $region27: #{tpu_custom_call.1} parent=5 // pred_region
        %s175 = ssub.s32 %s15, 1
        %s176 = sand.u32 %s42, 1
        %s177 = scalar_lea.sflag [#allocation3], %s176
        %s178 = sand.u32 %s42, 1
        %s179 = smul.addr %s178, 64
        %s180 = scalar_lea.vmem [#allocation2], %s179
        // Predicated region
        $region29: #{tpu_custom_call.1} parent=27 // pred_check
          %p181 = pneg %p55
        $region30: #{tpu_custom_call.1} parent=27 // pred_check_branch
          %183 = sbr.rel (%p181) target = $region32
        $region31: #{tpu_custom_call.1} parent=27 // pred_region
          %184 = dma.done %s177, 1024
        $region32: #{tpu_custom_call.1} parent=27 // pred_fallthru
          _
        // Predicated region
        $region33: #{tpu_custom_call.1} parent=27 // pred_check
          %p185 = pneg %p81
        $region34: #{tpu_custom_call.1} parent=27 // pred_check_branch
          %187 = sbr.rel (%p185) target = $region36
        $region35: #{tpu_custom_call.1} parent=27 // pred_region
          %188 = dma.done [#allocation6], 4096
        $region36: #{tpu_custom_call.1} parent=27 // pred_fallthru
          _
        %s189 = sand.u32 %s42, 1
        %s190 = scalar_lea.sflag [#allocation3], %s189
        %s191 = sand.u32 %s42, 1
        %s192 = smul.addr %s191, 64
        %s193 = scalar_lea.vmem [#allocation2], %s192
        %p194 = pneg %p55
        %p195 = pneg %p52
        %p196 = pneg %p81
        %p197 = pneg %p78
        %p198 = pneg %p109
        %p199 = pneg %p106
        %s200 = sand.u32 %s96, 1
        %s201 = scalar_lea.sflag [#allocation4], %s200
        %s202 = sand.u32 %s96, 1
        %s203 = smul.addr %s202, 256
        %s204 = scalar_lea.vmem [#allocation7], %s203
        %s205 = smul.u32 4, %s24
        %s206 = smul.u32 4, %s24
        %s207 = smul.u32 4, %s24
        %v208 = vld [vmem:[%s180] sm:$0xf]
        %v209 = vld [vmem:[%s180 + $0x4] sm:$0xf]
        %v210 = vld [vmem:[%s180 + $0x8] sm:$0xf]
        %v211 = vld [vmem:[%s180 + $0xc] sm:$0xf]
        %v212 = vld [vmem:[%s180 + $0x10] sm:$0xf]
        %v213 = vld [vmem:[%s180 + $0x14] sm:$0xf]
        %v214 = vld [vmem:[%s180 + $0x18] sm:$0xf]
        %v215 = vld [vmem:[%s180 + $0x1c] sm:$0xf]
        %v216 = vld [vmem:[%s180 + $0x20] sm:$0xf]
        %v217 = vld [vmem:[%s180 + $0x24] sm:$0xf]
        %v218 = vld [vmem:[%s180 + $0x28] sm:$0xf]
        %v219 = vld [vmem:[%s180 + $0x2c] sm:$0xf]
        %v220 = vld [vmem:[%s180 + $0x30] sm:$0xf]
        %v221 = vld [vmem:[%s180 + $0x34] sm:$0xf]
        %v222 = vld [vmem:[%s180 + $0x38] sm:$0xf]
        %v223 = vld [vmem:[%s180 + $0x3c] sm:$0xf]
        %v224 = vld [vmem:[#allocation5] sm:$0xf]
        %v225 = vld [vmem:[#allocation5 + $0x4] sm:$0xf]
        %v226 = vld [vmem:[#allocation5 + $0x8] sm:$0xf]
        %v227 = vld [vmem:[#allocation5 + $0xc] sm:$0xf]
        %v228 = vld [vmem:[#allocation5 + $0x10] sm:$0xf]
        %v229 = vld [vmem:[#allocation5 + $0x14] sm:$0xf]
        %v230 = vld [vmem:[#allocation5 + $0x18] sm:$0xf]
        %v231 = vld [vmem:[#allocation5 + $0x1c] sm:$0xf]
        %v232 = vld [vmem:[#allocation5 + $0x20] sm:$0xf]
        %v233 = vld [vmem:[#allocation5 + $0x24] sm:$0xf]
        %v234 = vld [vmem:[#allocation5 + $0x28] sm:$0xf]
        %v235 = vld [vmem:[#allocation5 + $0x2c] sm:$0xf]
        %v236 = vld [vmem:[#allocation5 + $0x30] sm:$0xf]
        %v237 = vld [vmem:[#allocation5 + $0x34] sm:$0xf]
        %v238 = vld [vmem:[#allocation5 + $0x38] sm:$0xf]
        %v239 = vld [vmem:[#allocation5 + $0x3c] sm:$0xf]
        %v240 = vld [vmem:[#allocation5 + $0x40] sm:$0xf]
        %v241 = vld [vmem:[#allocation5 + $0x44] sm:$0xf]
        %v242 = vld [vmem:[#allocation5 + $0x48] sm:$0xf]
        %v243 = vld [vmem:[#allocation5 + $0x4c] sm:$0xf]
        %v244 = vld [vmem:[#allocation5 + $0x50] sm:$0xf]
        %v245 = vld [vmem:[#allocation5 + $0x54] sm:$0xf]
        %v246 = vld [vmem:[#allocation5 + $0x58] sm:$0xf]
        %v247 = vld [vmem:[#allocation5 + $0x5c] sm:$0xf]
        %v248 = vld [vmem:[#allocation5 + $0x60] sm:$0xf]
        %v249 = vld [vmem:[#allocation5 + $0x64] sm:$0xf]
        %v250 = vld [vmem:[#allocation5 + $0x68] sm:$0xf]
        %v251 = vld [vmem:[#allocation5 + $0x6c] sm:$0xf]
        %v252 = vld [vmem:[#allocation5 + $0x70] sm:$0xf]
        %v253 = vld [vmem:[#allocation5 + $0x74] sm:$0xf]
        %v254 = vld [vmem:[#allocation5 + $0x78] sm:$0xf]
        %v255 = vld [vmem:[#allocation5 + $0x7c] sm:$0xf]
        %v256 = vld [vmem:[#allocation5 + $0x80] sm:$0xf]
        %v257 = vld [vmem:[#allocation5 + $0x84] sm:$0xf]
        %v258 = vld [vmem:[#allocation5 + $0x88] sm:$0xf]
        %v259 = vld [vmem:[#allocation5 + $0x8c] sm:$0xf]
        %v260 = vld [vmem:[#allocation5 + $0x90] sm:$0xf]
        %v261 = vld [vmem:[#allocation5 + $0x94] sm:$0xf]
        %v262 = vld [vmem:[#allocation5 + $0x98] sm:$0xf]
        %v263 = vld [vmem:[#allocation5 + $0x9c] sm:$0xf]
        %v264 = vld [vmem:[#allocation5 + $0xa0] sm:$0xf]
        %v265 = vld [vmem:[#allocation5 + $0xa4] sm:$0xf]
        %v266 = vld [vmem:[#allocation5 + $0xa8] sm:$0xf]
        %v267 = vld [vmem:[#allocation5 + $0xac] sm:$0xf]
        %v268 = vld [vmem:[#allocation5 + $0xb0] sm:$0xf]
        %v269 = vld [vmem:[#allocation5 + $0xb4] sm:$0xf]
        %v270 = vld [vmem:[#allocation5 + $0xb8] sm:$0xf]
        %v271 = vld [vmem:[#allocation5 + $0xbc] sm:$0xf]
        %v272 = vld [vmem:[#allocation5 + $0xc0] sm:$0xf]
        %v273 = vld [vmem:[#allocation5 + $0xc4] sm:$0xf]
        %v274 = vld [vmem:[#allocation5 + $0xc8] sm:$0xf]
        %v275 = vld [vmem:[#allocation5 + $0xcc] sm:$0xf]
        %v276 = vld [vmem:[#allocation5 + $0xd0] sm:$0xf]
        %v277 = vld [vmem:[#allocation5 + $0xd4] sm:$0xf]
        %v278 = vld [vmem:[#allocation5 + $0xd8] sm:$0xf]
        %v279 = vld [vmem:[#allocation5 + $0xdc] sm:$0xf]
        %v280 = vld [vmem:[#allocation5 + $0xe0] sm:$0xf]
        %v281 = vld [vmem:[#allocation5 + $0xe4] sm:$0xf]
        %v282 = vld [vmem:[#allocation5 + $0xe8] sm:$0xf]
        %v283 = vld [vmem:[#allocation5 + $0xec] sm:$0xf]
        %v284 = vld [vmem:[#allocation5 + $0xf0] sm:$0xf]
        %v285 = vld [vmem:[#allocation5 + $0xf4] sm:$0xf]
        %v286 = vld [vmem:[#allocation5 + $0xf8] sm:$0xf]
        %v287 = vld [vmem:[#allocation5 + $0xfc] sm:$0xf]
        %v288 = vlaneseq
        %v289 = vshrl.u32 %v288, 7
        %v290 = vsub.s32 0, %v289
        %v291 = vrot.slane %v208, %v290
        %v292 = vlaneseq
        %v293 = vshrl.u32 %v292, 7
        %v294 = vsub.s32 0, %v293
        %v295 = vrot.slane %v209, %v294
        %v296 = vlaneseq
        %v297 = vshrl.u32 %v296, 7
        %v298 = vsub.s32 0, %v297
        %v299 = vrot.slane %v210, %v298
        %v300 = vlaneseq
        %v301 = vshrl.u32 %v300, 7
        %v302 = vsub.s32 0, %v301
        %v303 = vrot.slane %v211, %v302
        %v304 = vlaneseq
        %v305 = vshrl.u32 %v304, 7
        %v306 = vsub.s32 0, %v305
        %v307 = vrot.slane %v212, %v306
        %v308 = vlaneseq
        %v309 = vshrl.u32 %v308, 7
        %v310 = vsub.s32 0, %v309
        %v311 = vrot.slane %v213, %v310
        %v312 = vlaneseq
        %v313 = vshrl.u32 %v312, 7
        %v314 = vsub.s32 0, %v313
        %v315 = vrot.slane %v214, %v314
        %v316 = vlaneseq
        %v317 = vshrl.u32 %v316, 7
        %v318 = vsub.s32 0, %v317
        %v319 = vrot.slane %v215, %v318
        %v320 = vlaneseq
        %v321 = vshrl.u32 %v320, 7
        %v322 = vsub.s32 0, %v321
        %v323 = vrot.slane %v216, %v322
        %v324 = vlaneseq
        %v325 = vshrl.u32 %v324, 7
        %v326 = vsub.s32 0, %v325
        %v327 = vrot.slane %v217, %v326
        %v328 = vlaneseq
        %v329 = vshrl.u32 %v328, 7
        %v330 = vsub.s32 0, %v329
        %v331 = vrot.slane %v218, %v330
        %v332 = vlaneseq
        %v333 = vshrl.u32 %v332, 7
        %v334 = vsub.s32 0, %v333
        %v335 = vrot.slane %v219, %v334
        %v336 = vlaneseq
        %v337 = vshrl.u32 %v336, 7
        %v338 = vsub.s32 0, %v337
        %v339 = vrot.slane %v220, %v338
        %v340 = vlaneseq
        %v341 = vshrl.u32 %v340, 7
        %v342 = vsub.s32 0, %v341
        %v343 = vrot.slane %v221, %v342
        %v344 = vlaneseq
        %v345 = vshrl.u32 %v344, 7
        %v346 = vsub.s32 0, %v345
        %v347 = vrot.slane %v222, %v346
        %v348 = vlaneseq
        %v349 = vshrl.u32 %v348, 7
        %v350 = vsub.s32 0, %v349
        %v351 = vrot.slane %v223, %v350
        %v352 = vmul.f32 %v291, %v224
        %v353 = vmul.f32 %v295, %v224
        %v354 = vmul.f32 %v299, %v224
        %v355 = vmul.f32 %v303, %v224
        %v356 = vmul.f32 %v291, %v228
        %v357 = vmul.f32 %v295, %v228
        %v358 = vmul.f32 %v299, %v228
        %v359 = vmul.f32 %v303, %v228
        %v360 = vmul.f32 %v291, %v232
        %v361 = vmul.f32 %v295, %v232
        %v362 = vmul.f32 %v299, %v232
        %v363 = vmul.f32 %v303, %v232
        %v364 = vmul.f32 %v291, %v236
        %v365 = vmul.f32 %v295, %v236
        %v366 = vmul.f32 %v299, %v236
        %v367 = vmul.f32 %v303, %v236
        %v368 = vmul.f32 %v307, %v240
        %v369 = vmul.f32 %v311, %v240
        %v370 = vmul.f32 %v315, %v240
        %v371 = vmul.f32 %v319, %v240
        %v372 = vmul.f32 %v307, %v244
        %v373 = vmul.f32 %v311, %v244
        %v374 = vmul.f32 %v315, %v244
        %v375 = vmul.f32 %v319, %v244
        %v376 = vmul.f32 %v307, %v248
        %v377 = vmul.f32 %v311, %v248
        %v378 = vmul.f32 %v315, %v248
        %v379 = vmul.f32 %v319, %v248
        %v380 = vmul.f32 %v307, %v252
        %v381 = vmul.f32 %v311, %v252
        %v382 = vmul.f32 %v315, %v252
        %v383 = vmul.f32 %v319, %v252
        %v384 = vmul.f32 %v323, %v256
        %v385 = vmul.f32 %v327, %v256
        %v386 = vmul.f32 %v331, %v256
        %v387 = vmul.f32 %v335, %v256
        %v388 = vmul.f32 %v323, %v260
        %v389 = vmul.f32 %v327, %v260
        %v390 = vmul.f32 %v331, %v260
        %v391 = vmul.f32 %v335, %v260
        %v392 = vmul.f32 %v323, %v264
        %v393 = vmul.f32 %v327, %v264
        %v394 = vmul.f32 %v331, %v264
        %v395 = vmul.f32 %v335, %v264
        %v396 = vmul.f32 %v323, %v268
        %v397 = vmul.f32 %v327, %v268
        %v398 = vmul.f32 %v331, %v268
        %v399 = vmul.f32 %v335, %v268
        %v400 = vmul.f32 %v339, %v272
        %v401 = vmul.f32 %v343, %v272
        %v402 = vmul.f32 %v347, %v272
        %v403 = vmul.f32 %v351, %v272
        %v404 = vmul.f32 %v339, %v276
        %v405 = vmul.f32 %v343, %v276
        %v406 = vmul.f32 %v347, %v276
        %v407 = vmul.f32 %v351, %v276
        %v408 = vmul.f32 %v339, %v280
        %v409 = vmul.f32 %v343, %v280
        %v410 = vmul.f32 %v347, %v280
        %v411 = vmul.f32 %v351, %v280
        %v412 = vmul.f32 %v339, %v284
        %v413 = vmul.f32 %v343, %v284
        %v414 = vmul.f32 %v347, %v284
        %v415 = vmul.f32 %v351, %v284
        %v416 = vlaneseq
        %v417 = vshrl.u32 %v416, 7
        %v418 = vsub.s32 1, %v417
        %v419 = vrot.slane %v208, %v418
        %v420 = vlaneseq
        %v421 = vshrl.u32 %v420, 7
        %v422 = vsub.s32 1, %v421
        %v423 = vrot.slane %v209, %v422
        %v424 = vlaneseq
        %v425 = vshrl.u32 %v424, 7
        %v426 = vsub.s32 1, %v425
        %v427 = vrot.slane %v210, %v426
        %v428 = vlaneseq
        %v429 = vshrl.u32 %v428, 7
        %v430 = vsub.s32 1, %v429
        %v431 = vrot.slane %v211, %v430
        %v432 = vlaneseq
        %v433 = vshrl.u32 %v432, 7
        %v434 = vsub.s32 1, %v433
        %v435 = vrot.slane %v212, %v434
        %v436 = vlaneseq
        %v437 = vshrl.u32 %v436, 7
        %v438 = vsub.s32 1, %v437
        %v439 = vrot.slane %v213, %v438
        %v440 = vlaneseq
        %v441 = vshrl.u32 %v440, 7
        %v442 = vsub.s32 1, %v441
        %v443 = vrot.slane %v214, %v442
        %v444 = vlaneseq
        %v445 = vshrl.u32 %v444, 7
        %v446 = vsub.s32 1, %v445
        %v447 = vrot.slane %v215, %v446
        %v448 = vlaneseq
        %v449 = vshrl.u32 %v448, 7
        %v450 = vsub.s32 1, %v449
        %v451 = vrot.slane %v216, %v450
        %v452 = vlaneseq
        %v453 = vshrl.u32 %v452, 7
        %v454 = vsub.s32 1, %v453
        %v455 = vrot.slane %v217, %v454
        %v456 = vlaneseq
        %v457 = vshrl.u32 %v456, 7
        %v458 = vsub.s32 1, %v457
        %v459 = vrot.slane %v218, %v458
        %v460 = vlaneseq
        %v461 = vshrl.u32 %v460, 7
        %v462 = vsub.s32 1, %v461
        %v463 = vrot.slane %v219, %v462
        %v464 = vlaneseq
        %v465 = vshrl.u32 %v464, 7
        %v466 = vsub.s32 1, %v465
        %v467 = vrot.slane %v220, %v466
        %v468 = vlaneseq
        %v469 = vshrl.u32 %v468, 7
        %v470 = vsub.s32 1, %v469
        %v471 = vrot.slane %v221, %v470
        %v472 = vlaneseq
        %v473 = vshrl.u32 %v472, 7
        %v474 = vsub.s32 1, %v473
        %v475 = vrot.slane %v222, %v474
        %v476 = vlaneseq
        %v477 = vshrl.u32 %v476, 7
        %v478 = vsub.s32 1, %v477
        %v479 = vrot.slane %v223, %v478
        %v480 = vmul.f32 %v419, %v225
        %v481 = vmul.f32 %v423, %v225
        %v482 = vmul.f32 %v427, %v225
        %v483 = vmul.f32 %v431, %v225
        %v484 = vmul.f32 %v419, %v229
        %v485 = vmul.f32 %v423, %v229
        %v486 = vmul.f32 %v427, %v229
        %v487 = vmul.f32 %v431, %v229
        %v488 = vmul.f32 %v419, %v233
        %v489 = vmul.f32 %v423, %v233
        %v490 = vmul.f32 %v427, %v233
        %v491 = vmul.f32 %v431, %v233
        %v492 = vmul.f32 %v419, %v237
        %v493 = vmul.f32 %v423, %v237
        %v494 = vmul.f32 %v427, %v237
        %v495 = vmul.f32 %v431, %v237
        %v496 = vmul.f32 %v435, %v241
        %v497 = vmul.f32 %v439, %v241
        %v498 = vmul.f32 %v443, %v241
        %v499 = vmul.f32 %v447, %v241
        %v500 = vmul.f32 %v435, %v245
        %v501 = vmul.f32 %v439, %v245
        %v502 = vmul.f32 %v443, %v245
        %v503 = vmul.f32 %v447, %v245
        %v504 = vmul.f32 %v435, %v249
        %v505 = vmul.f32 %v439, %v249
        %v506 = vmul.f32 %v443, %v249
        %v507 = vmul.f32 %v447, %v249
        %v508 = vmul.f32 %v435, %v253
        %v509 = vmul.f32 %v439, %v253
        %v510 = vmul.f32 %v443, %v253
        %v511 = vmul.f32 %v447, %v253
        %v512 = vmul.f32 %v451, %v257
        %v513 = vmul.f32 %v455, %v257
        %v514 = vmul.f32 %v459, %v257
        %v515 = vmul.f32 %v463, %v257
        %v516 = vmul.f32 %v451, %v261
        %v517 = vmul.f32 %v455, %v261
        %v518 = vmul.f32 %v459, %v261
        %v519 = vmul.f32 %v463, %v261
        %v520 = vmul.f32 %v451, %v265
        %v521 = vmul.f32 %v455, %v265
        %v522 = vmul.f32 %v459, %v265
        %v523 = vmul.f32 %v463, %v265
        %v524 = vmul.f32 %v451, %v269
        %v525 = vmul.f32 %v455, %v269
        %v526 = vmul.f32 %v459, %v269
        %v527 = vmul.f32 %v463, %v269
        %v528 = vmul.f32 %v467, %v273
        %v529 = vmul.f32 %v471, %v273
        %v530 = vmul.f32 %v475, %v273
        %v531 = vmul.f32 %v479, %v273
        %v532 = vmul.f32 %v467, %v277
        %v533 = vmul.f32 %v471, %v277
        %v534 = vmul.f32 %v475, %v277
        %v535 = vmul.f32 %v479, %v277
        %v536 = vmul.f32 %v467, %v281
        %v537 = vmul.f32 %v471, %v281
        %v538 = vmul.f32 %v475, %v281
        %v539 = vmul.f32 %v479, %v281
        %v540 = vmul.f32 %v467, %v285
        %v541 = vmul.f32 %v471, %v285
        %v542 = vmul.f32 %v475, %v285
        %v543 = vmul.f32 %v479, %v285
        %v544 = vadd.f32 %v352, %v480
        %v545 = vadd.f32 %v353, %v481
        %v546 = vadd.f32 %v354, %v482
        %v547 = vadd.f32 %v355, %v483
        %v548 = vadd.f32 %v356, %v484
        %v549 = vadd.f32 %v357, %v485
        %v550 = vadd.f32 %v358, %v486
        %v551 = vadd.f32 %v359, %v487
        %v552 = vadd.f32 %v360, %v488
        %v553 = vadd.f32 %v361, %v489
        %v554 = vadd.f32 %v362, %v490
        %v555 = vadd.f32 %v363, %v491
        %v556 = vadd.f32 %v364, %v492
        %v557 = vadd.f32 %v365, %v493
        %v558 = vadd.f32 %v366, %v494
        %v559 = vadd.f32 %v367, %v495
        %v560 = vadd.f32 %v368, %v496
        %v561 = vadd.f32 %v369, %v497
        %v562 = vadd.f32 %v370, %v498
        %v563 = vadd.f32 %v371, %v499
        %v564 = vadd.f32 %v372, %v500
        %v565 = vadd.f32 %v373, %v501
        %v566 = vadd.f32 %v374, %v502
        %v567 = vadd.f32 %v375, %v503
        %v568 = vadd.f32 %v376, %v504
        %v569 = vadd.f32 %v377, %v505
        %v570 = vadd.f32 %v378, %v506
        %v571 = vadd.f32 %v379, %v507
        %v572 = vadd.f32 %v380, %v508
        %v573 = vadd.f32 %v381, %v509
        %v574 = vadd.f32 %v382, %v510
        %v575 = vadd.f32 %v383, %v511
        %v576 = vadd.f32 %v384, %v512
        %v577 = vadd.f32 %v385, %v513
        %v578 = vadd.f32 %v386, %v514
        %v579 = vadd.f32 %v387, %v515
        %v580 = vadd.f32 %v388, %v516
        %v581 = vadd.f32 %v389, %v517
        %v582 = vadd.f32 %v390, %v518
        %v583 = vadd.f32 %v391, %v519
        %v584 = vadd.f32 %v392, %v520
        %v585 = vadd.f32 %v393, %v521
        %v586 = vadd.f32 %v394, %v522
        %v587 = vadd.f32 %v395, %v523
        %v588 = vadd.f32 %v396, %v524
        %v589 = vadd.f32 %v397, %v525
        %v590 = vadd.f32 %v398, %v526
        %v591 = vadd.f32 %v399, %v527
        %v592 = vadd.f32 %v400, %v528
        %v593 = vadd.f32 %v401, %v529
        %v594 = vadd.f32 %v402, %v530
        %v595 = vadd.f32 %v403, %v531
        %v596 = vadd.f32 %v404, %v532
        %v597 = vadd.f32 %v405, %v533
        %v598 = vadd.f32 %v406, %v534
        %v599 = vadd.f32 %v407, %v535
        %v600 = vadd.f32 %v408, %v536
        %v601 = vadd.f32 %v409, %v537
        %v602 = vadd.f32 %v410, %v538
        %v603 = vadd.f32 %v411, %v539
        %v604 = vadd.f32 %v412, %v540
        %v605 = vadd.f32 %v413, %v541
        %v606 = vadd.f32 %v414, %v542
        %v607 = vadd.f32 %v415, %v543
        %v608 = vlaneseq
        %v609 = vshrl.u32 %v608, 7
        %v610 = vsub.s32 2, %v609
        %v611 = vrot.slane %v208, %v610
        %v612 = vlaneseq
        %v613 = vshrl.u32 %v612, 7
        %v614 = vsub.s32 2, %v613
        %v615 = vrot.slane %v209, %v614
        %v616 = vlaneseq
        %v617 = vshrl.u32 %v616, 7
        %v618 = vsub.s32 2, %v617
        %v619 = vrot.slane %v210, %v618
        %v620 = vlaneseq
        %v621 = vshrl.u32 %v620, 7
        %v622 = vsub.s32 2, %v621
        %v623 = vrot.slane %v211, %v622
        %v624 = vlaneseq
        %v625 = vshrl.u32 %v624, 7
        %v626 = vsub.s32 2, %v625
        %v627 = vrot.slane %v212, %v626
        %v628 = vlaneseq
        %v629 = vshrl.u32 %v628, 7
        %v630 = vsub.s32 2, %v629
        %v631 = vrot.slane %v213, %v630
        %v632 = vlaneseq
        %v633 = vshrl.u32 %v632, 7
        %v634 = vsub.s32 2, %v633
        %v635 = vrot.slane %v214, %v634
        %v636 = vlaneseq
        %v637 = vshrl.u32 %v636, 7
        %v638 = vsub.s32 2, %v637
        %v639 = vrot.slane %v215, %v638
        %v640 = vlaneseq
        %v641 = vshrl.u32 %v640, 7
        %v642 = vsub.s32 2, %v641
        %v643 = vrot.slane %v216, %v642
        %v644 = vlaneseq
        %v645 = vshrl.u32 %v644, 7
        %v646 = vsub.s32 2, %v645
        %v647 = vrot.slane %v217, %v646
        %v648 = vlaneseq
        %v649 = vshrl.u32 %v648, 7
        %v650 = vsub.s32 2, %v649
        %v651 = vrot.slane %v218, %v650
        %v652 = vlaneseq
        %v653 = vshrl.u32 %v652, 7
        %v654 = vsub.s32 2, %v653
        %v655 = vrot.slane %v219, %v654
        %v656 = vlaneseq
        %v657 = vshrl.u32 %v656, 7
        %v658 = vsub.s32 2, %v657
        %v659 = vrot.slane %v220, %v658
        %v660 = vlaneseq
        %v661 = vshrl.u32 %v660, 7
        %v662 = vsub.s32 2, %v661
        %v663 = vrot.slane %v221, %v662
        %v664 = vlaneseq
        %v665 = vshrl.u32 %v664, 7
        %v666 = vsub.s32 2, %v665
        %v667 = vrot.slane %v222, %v666
        %v668 = vlaneseq
        %v669 = vshrl.u32 %v668, 7
        %v670 = vsub.s32 2, %v669
        %v671 = vrot.slane %v223, %v670
        %v672 = vmul.f32 %v611, %v226
        %v673 = vmul.f32 %v615, %v226
        %v674 = vmul.f32 %v619, %v226
        %v675 = vmul.f32 %v623, %v226
        %v676 = vmul.f32 %v611, %v230
        %v677 = vmul.f32 %v615, %v230
        %v678 = vmul.f32 %v619, %v230
        %v679 = vmul.f32 %v623, %v230
        %v680 = vmul.f32 %v611, %v234
        %v681 = vmul.f32 %v615, %v234
        %v682 = vmul.f32 %v619, %v234
        %v683 = vmul.f32 %v623, %v234
        %v684 = vmul.f32 %v611, %v238
        %v685 = vmul.f32 %v615, %v238
        %v686 = vmul.f32 %v619, %v238
        %v687 = vmul.f32 %v623, %v238
        %v688 = vmul.f32 %v627, %v242
        %v689 = vmul.f32 %v631, %v242
        %v690 = vmul.f32 %v635, %v242
        %v691 = vmul.f32 %v639, %v242
        %v692 = vmul.f32 %v627, %v246
        %v693 = vmul.f32 %v631, %v246
        %v694 = vmul.f32 %v635, %v246
        %v695 = vmul.f32 %v639, %v246
        %v696 = vmul.f32 %v627, %v250
        %v697 = vmul.f32 %v631, %v250
        %v698 = vmul.f32 %v635, %v250
        %v699 = vmul.f32 %v639, %v250
        %v700 = vmul.f32 %v627, %v254
        %v701 = vmul.f32 %v631, %v254
        %v702 = vmul.f32 %v635, %v254
        %v703 = vmul.f32 %v639, %v254
        %v704 = vmul.f32 %v643, %v258
        %v705 = vmul.f32 %v647, %v258
        %v706 = vmul.f32 %v651, %v258
        %v707 = vmul.f32 %v655, %v258
        %v708 = vmul.f32 %v643, %v262
        %v709 = vmul.f32 %v647, %v262
        %v710 = vmul.f32 %v651, %v262
        %v711 = vmul.f32 %v655, %v262
        %v712 = vmul.f32 %v643, %v266
        %v713 = vmul.f32 %v647, %v266
        %v714 = vmul.f32 %v651, %v266
        %v715 = vmul.f32 %v655, %v266
        %v716 = vmul.f32 %v643, %v270
        %v717 = vmul.f32 %v647, %v270
        %v718 = vmul.f32 %v651, %v270
        %v719 = vmul.f32 %v655, %v270
        %v720 = vmul.f32 %v659, %v274
        %v721 = vmul.f32 %v663, %v274
        %v722 = vmul.f32 %v667, %v274
        %v723 = vmul.f32 %v671, %v274
        %v724 = vmul.f32 %v659, %v278
        %v725 = vmul.f32 %v663, %v278
        %v726 = vmul.f32 %v667, %v278
        %v727 = vmul.f32 %v671, %v278
        %v728 = vmul.f32 %v659, %v282
        %v729 = vmul.f32 %v663, %v282
        %v730 = vmul.f32 %v667, %v282
        %v731 = vmul.f32 %v671, %v282
        %v732 = vmul.f32 %v659, %v286
        %v733 = vmul.f32 %v663, %v286
        %v734 = vmul.f32 %v667, %v286
        %v735 = vmul.f32 %v671, %v286
        %v736 = vadd.f32 %v544, %v672
        %v737 = vadd.f32 %v545, %v673
        %v738 = vadd.f32 %v546, %v674
        %v739 = vadd.f32 %v547, %v675
        %v740 = vadd.f32 %v548, %v676
        %v741 = vadd.f32 %v549, %v677
        %v742 = vadd.f32 %v550, %v678
        %v743 = vadd.f32 %v551, %v679
        %v744 = vadd.f32 %v552, %v680
        %v745 = vadd.f32 %v553, %v681
        %v746 = vadd.f32 %v554, %v682
        %v747 = vadd.f32 %v555, %v683
        %v748 = vadd.f32 %v556, %v684
        %v749 = vadd.f32 %v557, %v685
        %v750 = vadd.f32 %v558, %v686
        %v751 = vadd.f32 %v559, %v687
        %v752 = vadd.f32 %v560, %v688
        %v753 = vadd.f32 %v561, %v689
        %v754 = vadd.f32 %v562, %v690
        %v755 = vadd.f32 %v563, %v691
        %v756 = vadd.f32 %v564, %v692
        %v757 = vadd.f32 %v565, %v693
        %v758 = vadd.f32 %v566, %v694
        %v759 = vadd.f32 %v567, %v695
        %v760 = vadd.f32 %v568, %v696
        %v761 = vadd.f32 %v569, %v697
        %v762 = vadd.f32 %v570, %v698
        %v763 = vadd.f32 %v571, %v699
        %v764 = vadd.f32 %v572, %v700
        %v765 = vadd.f32 %v573, %v701
        %v766 = vadd.f32 %v574, %v702
        %v767 = vadd.f32 %v575, %v703
        %v768 = vadd.f32 %v576, %v704
        %v769 = vadd.f32 %v577, %v705
        %v770 = vadd.f32 %v578, %v706
        %v771 = vadd.f32 %v579, %v707
        %v772 = vadd.f32 %v580, %v708
        %v773 = vadd.f32 %v581, %v709
        %v774 = vadd.f32 %v582, %v710
        %v775 = vadd.f32 %v583, %v711
        %v776 = vadd.f32 %v584, %v712
        %v777 = vadd.f32 %v585, %v713
        %v778 = vadd.f32 %v586, %v714
        %v779 = vadd.f32 %v587, %v715
        %v780 = vadd.f32 %v588, %v716
        %v781 = vadd.f32 %v589, %v717
        %v782 = vadd.f32 %v590, %v718
        %v783 = vadd.f32 %v591, %v719
        %v784 = vadd.f32 %v592, %v720
        %v785 = vadd.f32 %v593, %v721
        %v786 = vadd.f32 %v594, %v722
        %v787 = vadd.f32 %v595, %v723
        %v788 = vadd.f32 %v596, %v724
        %v789 = vadd.f32 %v597, %v725
        %v790 = vadd.f32 %v598, %v726
        %v791 = vadd.f32 %v599, %v727
        %v792 = vadd.f32 %v600, %v728
        %v793 = vadd.f32 %v601, %v729
        %v794 = vadd.f32 %v602, %v730
        %v795 = vadd.f32 %v603, %v731
        %v796 = vadd.f32 %v604, %v732
        %v797 = vadd.f32 %v605, %v733
        %v798 = vadd.f32 %v606, %v734
        %v799 = vadd.f32 %v607, %v735
        %v800 = vlaneseq
        %v801 = vshrl.u32 %v800, 7
        %v802 = vsub.s32 3, %v801
        %v803 = vrot.slane %v208, %v802
        %v804 = vlaneseq
        %v805 = vshrl.u32 %v804, 7
        %v806 = vsub.s32 3, %v805
        %v807 = vrot.slane %v209, %v806
        %v808 = vlaneseq
        %v809 = vshrl.u32 %v808, 7
        %v810 = vsub.s32 3, %v809
        %v811 = vrot.slane %v210, %v810
        %v812 = vlaneseq
        %v813 = vshrl.u32 %v812, 7
        %v814 = vsub.s32 3, %v813
        %v815 = vrot.slane %v211, %v814
        %v816 = vlaneseq
        %v817 = vshrl.u32 %v816, 7
        %v818 = vsub.s32 3, %v817
        %v819 = vrot.slane %v212, %v818
        %v820 = vlaneseq
        %v821 = vshrl.u32 %v820, 7
        %v822 = vsub.s32 3, %v821
        %v823 = vrot.slane %v213, %v822
        %v824 = vlaneseq
        %v825 = vshrl.u32 %v824, 7
        %v826 = vsub.s32 3, %v825
        %v827 = vrot.slane %v214, %v826
        %v828 = vlaneseq
        %v829 = vshrl.u32 %v828, 7
        %v830 = vsub.s32 3, %v829
        %v831 = vrot.slane %v215, %v830
        %v832 = vlaneseq
        %v833 = vshrl.u32 %v832, 7
        %v834 = vsub.s32 3, %v833
        %v835 = vrot.slane %v216, %v834
        %v836 = vlaneseq
        %v837 = vshrl.u32 %v836, 7
        %v838 = vsub.s32 3, %v837
        %v839 = vrot.slane %v217, %v838
        %v840 = vlaneseq
        %v841 = vshrl.u32 %v840, 7
        %v842 = vsub.s32 3, %v841
        %v843 = vrot.slane %v218, %v842
        %v844 = vlaneseq
        %v845 = vshrl.u32 %v844, 7
        %v846 = vsub.s32 3, %v845
        %v847 = vrot.slane %v219, %v846
        %v848 = vlaneseq
        %v849 = vshrl.u32 %v848, 7
        %v850 = vsub.s32 3, %v849
        %v851 = vrot.slane %v220, %v850
        %v852 = vlaneseq
        %v853 = vshrl.u32 %v852, 7
        %v854 = vsub.s32 3, %v853
        %v855 = vrot.slane %v221, %v854
        %v856 = vlaneseq
        %v857 = vshrl.u32 %v856, 7
        %v858 = vsub.s32 3, %v857
        %v859 = vrot.slane %v222, %v858
        %v860 = vlaneseq
        %v861 = vshrl.u32 %v860, 7
        %v862 = vsub.s32 3, %v861
        %v863 = vrot.slane %v223, %v862
        %v864 = vmul.f32 %v803, %v227
        %v865 = vmul.f32 %v807, %v227
        %v866 = vmul.f32 %v811, %v227
        %v867 = vmul.f32 %v815, %v227
        %v868 = vmul.f32 %v803, %v231
        %v869 = vmul.f32 %v807, %v231
        %v870 = vmul.f32 %v811, %v231
        %v871 = vmul.f32 %v815, %v231
        %v872 = vmul.f32 %v803, %v235
        %v873 = vmul.f32 %v807, %v235
        %v874 = vmul.f32 %v811, %v235
        %v875 = vmul.f32 %v815, %v235
        %v876 = vmul.f32 %v803, %v239
        %v877 = vmul.f32 %v807, %v239
        %v878 = vmul.f32 %v811, %v239
        %v879 = vmul.f32 %v815, %v239
        %v880 = vmul.f32 %v819, %v243
        %v881 = vmul.f32 %v823, %v243
        %v882 = vmul.f32 %v827, %v243
        %v883 = vmul.f32 %v831, %v243
        %v884 = vmul.f32 %v819, %v247
        %v885 = vmul.f32 %v823, %v247
        %v886 = vmul.f32 %v827, %v247
        %v887 = vmul.f32 %v831, %v247
        %v888 = vmul.f32 %v819, %v251
        %v889 = vmul.f32 %v823, %v251
        %v890 = vmul.f32 %v827, %v251
        %v891 = vmul.f32 %v831, %v251
        %v892 = vmul.f32 %v819, %v255
        %v893 = vmul.f32 %v823, %v255
        %v894 = vmul.f32 %v827, %v255
        %v895 = vmul.f32 %v831, %v255
        %v896 = vmul.f32 %v835, %v259
        %v897 = vmul.f32 %v839, %v259
        %v898 = vmul.f32 %v843, %v259
        %v899 = vmul.f32 %v847, %v259
        %v900 = vmul.f32 %v835, %v263
        %v901 = vmul.f32 %v839, %v263
        %v902 = vmul.f32 %v843, %v263
        %v903 = vmul.f32 %v847, %v263
        %v904 = vmul.f32 %v835, %v267
        %v905 = vmul.f32 %v839, %v267
        %v906 = vmul.f32 %v843, %v267
        %v907 = vmul.f32 %v847, %v267
        %v908 = vmul.f32 %v835, %v271
        %v909 = vmul.f32 %v839, %v271
        %v910 = vmul.f32 %v843, %v271
        %v911 = vmul.f32 %v847, %v271
        %v912 = vmul.f32 %v851, %v275
        %v913 = vmul.f32 %v855, %v275
        %v914 = vmul.f32 %v859, %v275
        %v915 = vmul.f32 %v863, %v275
        %v916 = vmul.f32 %v851, %v279
        %v917 = vmul.f32 %v855, %v279
        %v918 = vmul.f32 %v859, %v279
        %v919 = vmul.f32 %v863, %v279
        %v920 = vmul.f32 %v851, %v283
        %v921 = vmul.f32 %v855, %v283
        %v922 = vmul.f32 %v859, %v283
        %v923 = vmul.f32 %v863, %v283
        %v924 = vmul.f32 %v851, %v287
        %v925 = vmul.f32 %v855, %v287
        %v926 = vmul.f32 %v859, %v287
        %v927 = vmul.f32 %v863, %v287
        %v928 = vadd.f32 %v736, %v864
        %v929 = vadd.f32 %v737, %v865
        %v930 = vadd.f32 %v738, %v866
        %v931 = vadd.f32 %v739, %v867
        %v932 = vadd.f32 %v740, %v868
        %v933 = vadd.f32 %v741, %v869
        %v934 = vadd.f32 %v742, %v870
        %v935 = vadd.f32 %v743, %v871
        %v936 = vadd.f32 %v744, %v872
        %v937 = vadd.f32 %v745, %v873
        %v938 = vadd.f32 %v746, %v874
        %v939 = vadd.f32 %v747, %v875
        %v940 = vadd.f32 %v748, %v876
        %v941 = vadd.f32 %v749, %v877
        %v942 = vadd.f32 %v750, %v878
        %v943 = vadd.f32 %v751, %v879
        %v944 = vadd.f32 %v752, %v880
        %v945 = vadd.f32 %v753, %v881
        %v946 = vadd.f32 %v754, %v882
        %v947 = vadd.f32 %v755, %v883
        %v948 = vadd.f32 %v756, %v884
        %v949 = vadd.f32 %v757, %v885
        %v950 = vadd.f32 %v758, %v886
        %v951 = vadd.f32 %v759, %v887
        %v952 = vadd.f32 %v760, %v888
        %v953 = vadd.f32 %v761, %v889
        %v954 = vadd.f32 %v762, %v890
        %v955 = vadd.f32 %v763, %v891
        %v956 = vadd.f32 %v764, %v892
        %v957 = vadd.f32 %v765, %v893
        %v958 = vadd.f32 %v766, %v894
        %v959 = vadd.f32 %v767, %v895
        %v960 = vadd.f32 %v768, %v896
        %v961 = vadd.f32 %v769, %v897
        %v962 = vadd.f32 %v770, %v898
        %v963 = vadd.f32 %v771, %v899
        %v964 = vadd.f32 %v772, %v900
        %v965 = vadd.f32 %v773, %v901
        %v966 = vadd.f32 %v774, %v902
        %v967 = vadd.f32 %v775, %v903
        %v968 = vadd.f32 %v776, %v904
        %v969 = vadd.f32 %v777, %v905
        %v970 = vadd.f32 %v778, %v906
        %v971 = vadd.f32 %v779, %v907
        %v972 = vadd.f32 %v780, %v908
        %v973 = vadd.f32 %v781, %v909
        %v974 = vadd.f32 %v782, %v910
        %v975 = vadd.f32 %v783, %v911
        %v976 = vadd.f32 %v784, %v912
        %v977 = vadd.f32 %v785, %v913
        %v978 = vadd.f32 %v786, %v914
        %v979 = vadd.f32 %v787, %v915
        %v980 = vadd.f32 %v788, %v916
        %v981 = vadd.f32 %v789, %v917
        %v982 = vadd.f32 %v790, %v918
        %v983 = vadd.f32 %v791, %v919
        %v984 = vadd.f32 %v792, %v920
        %v985 = vadd.f32 %v793, %v921
        %v986 = vadd.f32 %v794, %v922
        %v987 = vadd.f32 %v795, %v923
        %v988 = vadd.f32 %v796, %v924
        %v989 = vadd.f32 %v797, %v925
        %v990 = vadd.f32 %v798, %v926
        %v991 = vadd.f32 %v799, %v927
        %vm992 = vcmask 658432
        %993 = vst.msk [vmem:[%s204] sm:$0xf] %vm992, %v928
        %994 = vst.msk [vmem:[%s204 + $0x4] sm:$0xf] %vm992, %v929
        %995 = vst.msk [vmem:[%s204 + $0x8] sm:$0xf] %vm992, %v930
        %996 = vst.msk [vmem:[%s204 + $0xc] sm:$0xf] %vm992, %v931
        %997 = vst.msk [vmem:[%s204 + $0x10] sm:$0xf] %vm992, %v932
        %998 = vst.msk [vmem:[%s204 + $0x14] sm:$0xf] %vm992, %v933
        %999 = vst.msk [vmem:[%s204 + $0x18] sm:$0xf] %vm992, %v934
        %1000 = vst.msk [vmem:[%s204 + $0x1c] sm:$0xf] %vm992, %v935
        %1001 = vst.msk [vmem:[%s204 + $0x20] sm:$0xf] %vm992, %v936
        %1002 = vst.msk [vmem:[%s204 + $0x24] sm:$0xf] %vm992, %v937
        %1003 = vst.msk [vmem:[%s204 + $0x28] sm:$0xf] %vm992, %v938
        %1004 = vst.msk [vmem:[%s204 + $0x2c] sm:$0xf] %vm992, %v939
        %1005 = vst.msk [vmem:[%s204 + $0x30] sm:$0xf] %vm992, %v940
        %1006 = vst.msk [vmem:[%s204 + $0x34] sm:$0xf] %vm992, %v941
        %1007 = vst.msk [vmem:[%s204 + $0x38] sm:$0xf] %vm992, %v942
        %1008 = vst.msk [vmem:[%s204 + $0x3c] sm:$0xf] %vm992, %v943
        %1009 = vst.msk [vmem:[%s204 + $0x40] sm:$0xf] %vm992, %v944
        %1010 = vst.msk [vmem:[%s204 + $0x44] sm:$0xf] %vm992, %v945
        %1011 = vst.msk [vmem:[%s204 + $0x48] sm:$0xf] %vm992, %v946
        %1012 = vst.msk [vmem:[%s204 + $0x4c] sm:$0xf] %vm992, %v947
        %1013 = vst.msk [vmem:[%s204 + $0x50] sm:$0xf] %vm992, %v948
        %1014 = vst.msk [vmem:[%s204 + $0x54] sm:$0xf] %vm992, %v949
        %1015 = vst.msk [vmem:[%s204 + $0x58] sm:$0xf] %vm992, %v950
        %1016 = vst.msk [vmem:[%s204 + $0x5c] sm:$0xf] %vm992, %v951
        %1017 = vst.msk [vmem:[%s204 + $0x60] sm:$0xf] %vm992, %v952
        %1018 = vst.msk [vmem:[%s204 + $0x64] sm:$0xf] %vm992, %v953
        %1019 = vst.msk [vmem:[%s204 + $0x68] sm:$0xf] %vm992, %v954
        %1020 = vst.msk [vmem:[%s204 + $0x6c] sm:$0xf] %vm992, %v955
        %1021 = vst.msk [vmem:[%s204 + $0x70] sm:$0xf] %vm992, %v956
        %1022 = vst.msk [vmem:[%s204 + $0x74] sm:$0xf] %vm992, %v957
        %1023 = vst.msk [vmem:[%s204 + $0x78] sm:$0xf] %vm992, %v958
        %1024 = vst.msk [vmem:[%s204 + $0x7c] sm:$0xf] %vm992, %v959
        %1025 = vst.msk [vmem:[%s204 + $0x80] sm:$0xf] %vm992, %v960
        %1026 = vst.msk [vmem:[%s204 + $0x84] sm:$0xf] %vm992, %v961
        %1027 = vst.msk [vmem:[%s204 + $0x88] sm:$0xf] %vm992, %v962
        %1028 = vst.msk [vmem:[%s204 + $0x8c] sm:$0xf] %vm992, %v963
        %1029 = vst.msk [vmem:[%s204 + $0x90] sm:$0xf] %vm992, %v964
        %1030 = vst.msk [vmem:[%s204 + $0x94] sm:$0xf] %vm992, %v965
        %1031 = vst.msk [vmem:[%s204 + $0x98] sm:$0xf] %vm992, %v966
        %1032 = vst.msk [vmem:[%s204 + $0x9c] sm:$0xf] %vm992, %v967
        %1033 = vst.msk [vmem:[%s204 + $0xa0] sm:$0xf] %vm992, %v968
        %1034 = vst.msk [vmem:[%s204 + $0xa4] sm:$0xf] %vm992, %v969
        %1035 = vst.msk [vmem:[%s204 + $0xa8] sm:$0xf] %vm992, %v970
        %1036 = vst.msk [vmem:[%s204 + $0xac] sm:$0xf] %vm992, %v971
        %1037 = vst.msk [vmem:[%s204 + $0xb0] sm:$0xf] %vm992, %v972
        %1038 = vst.msk [vmem:[%s204 + $0xb4] sm:$0xf] %vm992, %v973
        %1039 = vst.msk [vmem:[%s204 + $0xb8] sm:$0xf] %vm992, %v974
        %1040 = vst.msk [vmem:[%s204 + $0xbc] sm:$0xf] %vm992, %v975
        %1041 = vst.msk [vmem:[%s204 + $0xc0] sm:$0xf] %vm992, %v976
        %1042 = vst.msk [vmem:[%s204 + $0xc4] sm:$0xf] %vm992, %v977
        %1043 = vst.msk [vmem:[%s204 + $0xc8] sm:$0xf] %vm992, %v978
        %1044 = vst.msk [vmem:[%s204 + $0xcc] sm:$0xf] %vm992, %v979
        %1045 = vst.msk [vmem:[%s204 + $0xd0] sm:$0xf] %vm992, %v980
        %1046 = vst.msk [vmem:[%s204 + $0xd4] sm:$0xf] %vm992, %v981
        %1047 = vst.msk [vmem:[%s204 + $0xd8] sm:$0xf] %vm992, %v982
        %1048 = vst.msk [vmem:[%s204 + $0xdc] sm:$0xf] %vm992, %v983
        %1049 = vst.msk [vmem:[%s204 + $0xe0] sm:$0xf] %vm992, %v984
        %1050 = vst.msk [vmem:[%s204 + $0xe4] sm:$0xf] %vm992, %v985
        %1051 = vst.msk [vmem:[%s204 + $0xe8] sm:$0xf] %vm992, %v986
        %1052 = vst.msk [vmem:[%s204 + $0xec] sm:$0xf] %vm992, %v987
        %1053 = vst.msk [vmem:[%s204 + $0xf0] sm:$0xf] %vm992, %v988
        %1054 = vst.msk [vmem:[%s204 + $0xf4] sm:$0xf] %vm992, %v989
        %1055 = vst.msk [vmem:[%s204 + $0xf8] sm:$0xf] %vm992, %v990
        %1056 = vst.msk [vmem:[%s204 + $0xfc] sm:$0xf] %vm992, %v991
        %s1057 = sand.u32 %s96, 1
        %s1058 = scalar_lea.sflag [#allocation4], %s1057
        %s1059 = sand.u32 %s96, 1
        %s1060 = smul.addr %s1059, 256
        %s1061 = scalar_lea.vmem [#allocation7], %s1060
        // Predicated region
        $region37: #{tpu_custom_call.1} parent=27 // pred_check
          %p1062 = pneg %p106
        $region38: #{tpu_custom_call.1} parent=27 // pred_check_branch
          %1064 = sbr.rel (%p1062) target = $region40
        $region39: #{tpu_custom_call.1} parent=27 // pred_region
          %s1065 = smul.u32 4, %s24
          %s1067 = ssub.s32 4096, 4096
          %1068 = vsyncadd %s1058, %s1067
          %s1069 = smul.addr %s1065, 16
          %s1070 = smul.addr %s25, 64
          %s1071 = sadd.s32 %s1069, %s1070
          %s1072 = smul.addr %s1071, 64
          %s1073 = scalar_lea.hbm %s2, %s1072
          %s1074 = sshll.u32 %s1061, 4
          %s1075 = int_to_ptr.vmem [resolvable:$true] %s1074
          %1080 = dma.vmem_to_hbm [thread:$0]  %s1075, 4096, %s1073, %s1058, 64, 64, 4
        $region40: #{tpu_custom_call.1} parent=27 // pred_fallthru
          _
      $region28: #{tpu_custom_call.1} parent=5 // pred_fallthru
        _
      %p1081 = scmp.le.s32.totalorder 2, %s15
      // Predicated region
      $region41: #{tpu_custom_call.1} parent=5 // pred_check
        %p1082 = pneg %p1081
      $region42: #{tpu_custom_call.1} parent=5 // pred_check_branch
        %1084 = sbr.rel (%p1082) target = $region44
      $region43: #{tpu_custom_call.1} parent=5 // pred_region
        %s1085 = ssub.s32 %s15, 2
        // Predicated region
        $region45: #{tpu_custom_call.1} parent=43 // pred_check
          %p1086 = pneg %p112
        $region46: #{tpu_custom_call.1} parent=43 // pred_check_branch
          %1088 = sbr.rel (%p1086) target = $region48
        $region47: #{tpu_custom_call.1} parent=43 // pred_region
          %s1089 = sand.u32 %s97, 1
          %s1090 = scalar_lea.sflag [#allocation4], %s1089
          %s1091 = sand.u32 %s97, 1
          %s1092 = smul.addr %s1091, 256
          %s1093 = scalar_lea.vmem [#allocation7], %s1092
          %1094 = dma.done %s1090, 4096
        $region48: #{tpu_custom_call.1} parent=43 // pred_fallthru
          _
      $region44: #{tpu_custom_call.1} parent=5 // pred_fallthru
        _
    $region6: #{tpu_custom_call.1} parent=1 // loop_footer
      %s19 = sadd.s32 1, %s15
    $region7: #{tpu_custom_call.1} parent=1 // loop_footer_branch
      %14 = sbr.rel target = $region3
    $region8: #{tpu_custom_call.1} parent=1 // loop_exit
      _
    %1095 = vsyncpa [#allocation3], 1
    %s1096 = scalar_lea.sflag [#allocation3], 1
    %1097 = vsyncpa %s1096, 1
    %1098 = vsyncpa [#allocation6], 1
    %1099 = vsyncpa [#allocation4], 1
    %s1100 = scalar_lea.sflag [#allocation4], 1
    %1101 = vsyncpa %s1100, 1

</llo_original>
